<compile_context>
chip_gen: v5e
topology: v5e:2x2
jax: 0.10.0
libtpu: 0.0.40
codegen_flags: <defaults>
</compile_context>

<pallas_src>
import jax
import jax.numpy as jnp
from jax.experimental import pallas as pl
from jax.experimental.pallas import tpu as pltpu


_NEG_BIG = -1e30  # bias padding value -> padded softmax columns are exactly 0


def _round_up(x, m):
    return ((x + m - 1) // m) * m


def abae_kernel(xw_ref, seg_ref, wlinT_ref, blin_ref, aemb_ref, r_ref, probs_ref):
    """One batch tile of the ABAE forward pass.

    xw_ref    : (TB*L, E)  bf16  gathered word embeddings, flattened per tile
    seg_ref   : (TB, TB*L) bf16  block-diagonal ones (segment-sum operator)
    wlinT_ref : (E, Apad)  f32   pre-transposed linear weight, zero-padded cols
    blin_ref  : (1, Apad)  f32   linear bias, padded cols = -1e30
    aemb_ref  : (Apad, E)  f32   aspect embeddings, zero-padded rows
    r_ref     : (TB, E)    f32   reconstruction output
    probs_ref : (TB, Apad) f32   aspect probabilities (lane-dense; sliced outside)
    """
    tb = seg_ref.shape[0]
    seq_len = xw_ref.shape[0] // tb
    inv_len = jnp.float32(1.0 / seq_len)

    # EmbeddingBag(mode='mean'): segment sums on the MXU (bf16 in, f32 accumulate),
    # then a single f32 scale by 1/L.
    enc = jnp.dot(seg_ref[...], xw_ref[...],
                  preferred_element_type=jnp.float32) * inv_len          # (TB, E)

    # Linear: enc @ W^T + b  (weight already transposed in the wrapper).
    logits = jnp.dot(enc, wlinT_ref[...],
                     preferred_element_type=jnp.float32) + blin_ref[...]  # (TB, Apad)

    # Numerically-stable softmax over the (padded) aspect axis.
    m = jnp.max(logits, axis=1, keepdims=True)
    e = jnp.exp(logits - m)
    denom = jnp.sum(e, axis=1, keepdims=True)
    probs = e * pl.reciprocal(denom, approx=True)
    probs_ref[...] = probs.astype(probs_ref.dtype)

    # Reconstruction ('centr'): r = a_probs @ a_emb. Padded prob columns are exactly 0.
    r_ref[...] = jnp.dot(probs, aemb_ref[...],
                         preferred_element_type=jnp.float32).astype(r_ref.dtype)


def aspect_autoencoder_forward(inputs, w_emb, w_lin, b_lin, a_emb, *, block_b=None):
    """Eval-mode forward of AspectAutoencoder (attention=False, recon='centr').

    inputs : (B, L) int32 token ids (every segment has exactly L valid tokens)
    w_emb  : (V, E) word embedding table (EmbeddingBag weight)
    w_lin  : (A, E) linear weight
    b_lin  : (A,)   linear bias
    a_emb  : (A, E) aspect embeddings
    Returns (r, a_probs) with shapes (B, E), (B, A), both float32.
    """
    B, L = inputs.shape
    V, E = w_emb.shape
    A = a_emb.shape[0]
    Apad = _round_up(A, 128)

    # --- batch tile size: conservative VMEM budget that fits v5e/v6e/v7x -----------
    if block_b is None:
        x_row_bytes = L * E * 2  # one segment of bf16 embeddings
        tb = (2 * 1024 * 1024) // max(x_row_bytes, 1)
        tb = max(8, min(128, (tb // 8) * 8))
    else:
        tb = max(8, (int(block_b) // 8) * 8)
    tb = min(tb, _round_up(B, 8))
    Bp = _round_up(B, tb)

    # --- host-side glue (one-time, tiny) -------------------------------------------
    inputs_p = inputs
    if Bp != B:
        inputs_p = jnp.pad(inputs, ((0, Bp - B), (0, 0)))          # pad with token 0

    # Embedding gather stays in XLA, but in bf16 so the big tensor is half the bytes.
    x_flat = jnp.take(w_emb.astype(jnp.bfloat16),
                      inputs_p.reshape(-1), axis=0)                # (Bp*L, E) bf16

    # Block-diagonal segment-sum operator (ones), built once, grid-invariant.
    seg_ids = jnp.arange(tb * L) // L
    seg = (seg_ids[None, :] == jnp.arange(tb)[:, None]).astype(jnp.bfloat16)  # (tb, tb*L)

    # Pre-transposed / lane-padded parameters.
    wlinT = jnp.zeros((E, Apad), jnp.float32).at[:, :A].set(w_lin.astype(jnp.float32).T)
    blinp = jnp.full((1, Apad), _NEG_BIG, jnp.float32).at[0, :A].set(b_lin.astype(jnp.float32))
    aembp = jnp.zeros((Apad, E), jnp.float32).at[:A, :].set(a_emb.astype(jnp.float32))

    grid = (Bp // tb,)
    r, probs = pl.pallas_call(
        abae_kernel,
        out_shape=(
            jax.ShapeDtypeStruct((Bp, E), jnp.float32),
            jax.ShapeDtypeStruct((Bp, Apad), jnp.float32),
        ),
        grid=grid,
        in_specs=[
            pl.BlockSpec((tb * L, E), lambda i: (i, 0)),      # per-tile embeddings
            pl.BlockSpec((tb, tb * L), lambda i: (0, 0)),     # grid-invariant
            pl.BlockSpec((E, Apad), lambda i: (0, 0)),        # grid-invariant
            pl.BlockSpec((1, Apad), lambda i: (0, 0)),        # grid-invariant
            pl.BlockSpec((Apad, E), lambda i: (0, 0)),        # grid-invariant
        ],
        out_specs=(
            pl.BlockSpec((tb, E), lambda i: (i, 0)),
            pl.BlockSpec((tb, Apad), lambda i: (i, 0)),
        ),
        compiler_params=pltpu.CompilerParams(
            dimension_semantics=("parallel",),
            vmem_limit_bytes=32 * 1024 * 1024,
        ),
    )(x_flat, seg, wlinT, blinp, aembp)

    return r[:B], probs[:B, :A]


def _reference(inputs, w_emb, w_lin, b_lin, a_emb):
    x = jnp.take(w_emb, inputs, axis=0)
    enc = jnp.mean(x, axis=1)
    logits = enc @ w_lin.T + b_lin
    probs = jax.nn.softmax(logits, axis=1)
    return probs @ a_emb, probs


if __name__ == "__main__":
    # Small shapes consistent with the module (B not a multiple of the tile to
    # exercise batch padding; grid has 3 steps with block_b=8).
    B, L = 20, 16         # batch of 20 segments, 16 words each
    V, E = 64, 32         # vocab_size, emb_size
    A = 10                # num_aspects

    key = jax.random.PRNGKey(0)
    k_in, k_w, k_lw, k_lb, k_a = jax.random.split(key, 5)

    inputs = jax.random.randint(k_in, (B, L), 0, V, dtype=jnp.int32)
    w_emb = jax.random.uniform(k_w, (V, E), jnp.float32, -0.1, 0.1)
    w_lin = jax.random.uniform(k_lw, (A, E), jnp.float32, -0.2, 0.2)
    b_lin = jax.random.uniform(k_lb, (A,), jnp.float32, -0.2, 0.2)
    a_emb = jax.random.uniform(k_a, (A, E), jnp.float32, -0.1, 0.1)

    r, a_probs = aspect_autoencoder_forward(inputs, w_emb, w_lin, b_lin, a_emb,
                                            block_b=8)
    jax.block_until_ready((r, a_probs))

    assert r.shape == (B, E) and a_probs.shape == (B, A)

    # Tight check: reference that uses the same bf16 storage of the embedding table
    # (isolates exactly the bf16-streaming decision; all other math is f32).
    w_emb_bf = w_emb.astype(jnp.bfloat16).astype(jnp.float32)
    r_ref_bf, p_ref_bf = _reference(inputs, w_emb_bf, w_lin, b_lin, a_emb)
    assert jnp.allclose(r, r_ref_bf, atol=1e-2, rtol=1e-2)
    assert jnp.allclose(a_probs, p_ref_bf, atol=1e-2, rtol=1e-2)

    # Check against the full-f32 PyTorch semantics.
    r_ref, p_ref = _reference(inputs, w_emb, w_lin, b_lin, a_emb)
    assert jnp.allclose(r, r_ref, atol=2e-2, rtol=2e-2)
    assert jnp.allclose(a_probs, p_ref, atol=2e-2, rtol=2e-2)

    # Softmax rows sum to ~1 (approx reciprocal tolerance).
    assert jnp.allclose(jnp.sum(a_probs, axis=1), 1.0, atol=1e-2)

    print("KERNEL_OK")
</pallas_src>

<mosaic_0001>
module attributes {stable_mosaic.version = 11 : i64} {
  func.func @abae_kernel(%arg0: i32, %arg1: memref<128x32xbf16, #tpu.memory_space<vmem>>, %arg2: memref<8x128xbf16, #tpu.memory_space<vmem>>, %arg3: memref<32x128xf32, #tpu.memory_space<vmem>>, %arg4: memref<1x128xf32, #tpu.memory_space<vmem>>, %arg5: memref<128x32xf32, #tpu.memory_space<vmem>>, %arg6: memref<8x32xf32, #tpu.memory_space<vmem>>, %arg7: memref<8x128xf32, #tpu.memory_space<vmem>>) attributes {dimension_semantics = [#tpu.dimension_semantics<parallel>], iteration_bounds = array<i64: 3>, scalar_prefetch = 0 : i64, scratch_operands = 0 : i64, tpu.core_type = #tpu.core_type<tc>, window_params = [{transform_indices = @transform_0, window_bounds = array<i64: 128, 32>}, {pipeline_mode = #tpu.pipeline_mode<synchronous>, transform_indices = @transform_1, window_bounds = array<i64: 8, 128>}, {pipeline_mode = #tpu.pipeline_mode<synchronous>, transform_indices = @transform_2, window_bounds = array<i64: 32, 128>}, {pipeline_mode = #tpu.pipeline_mode<synchronous>, transform_indices = @transform_3, window_bounds = array<i64: 1, 128>}, {pipeline_mode = #tpu.pipeline_mode<synchronous>, transform_indices = @transform_4, window_bounds = array<i64: 128, 32>}, {transform_indices = @transform_5, window_bounds = array<i64: 8, 32>}, {transform_indices = @transform_6, window_bounds = array<i64: 8, 128>}]} {
    %c0 = arith.constant 0 : index
    %c0_0 = arith.constant 0 : index
    %0 = vector.load %arg2[%c0, %c0_0] : memref<8x128xbf16, #tpu.memory_space<vmem>>, vector<8x128xbf16>
    %c0_1 = arith.constant 0 : index
    %c0_2 = arith.constant 0 : index
    %1 = vector.load %arg1[%c0_1, %c0_2] : memref<128x32xbf16, #tpu.memory_space<vmem>>, vector<128x32xbf16>
    %cst = arith.constant dense<0.000000e+00> : vector<8x32xf32>
    %2 = tpu.matmul %0, %1, %cst {dimension_numbers = #tpu.dot_dimension_numbers<[1], [0], [0], [1], [0, 0, 1, 1], [], []>} : vector<8x128xbf16>, vector<128x32xbf16>, vector<8x32xf32> -> vector<8x32xf32>
    %cst_3 = arith.constant 6.250000e-02 : f32
    %3 = vector.broadcast %cst_3 : f32 to vector<8x32xf32>
    %4 = arith.mulf %2, %3 : vector<8x32xf32>
    %c0_4 = arith.constant 0 : index
    %c0_5 = arith.constant 0 : index
    %5 = vector.load %arg3[%c0_4, %c0_5] : memref<32x128xf32, #tpu.memory_space<vmem>>, vector<32x128xf32>
    %cst_6 = arith.constant dense<0.000000e+00> : vector<8x128xf32>
    %6 = tpu.matmul %4, %5, %cst_6 {dimension_numbers = #tpu.dot_dimension_numbers<[1], [0], [0], [1], [0, 0, 1, 1], [], []>} : vector<8x32xf32>, vector<32x128xf32>, vector<8x128xf32> -> vector<8x128xf32>
    %c0_7 = arith.constant 0 : index
    %c0_8 = arith.constant 0 : index
    %7 = vector.load %arg4[%c0_7, %c0_8] : memref<1x128xf32, #tpu.memory_space<vmem>>, vector<1x128xf32>
    %8 = vector.broadcast %7 : vector<1x128xf32> to vector<8x128xf32>
    %9 = arith.addf %6, %8 : vector<8x128xf32>
    %cst_9 = arith.constant dense<0xFF800000> : vector<8xf32>
    %10 = vector.multi_reduction <maximumf>, %9, %cst_9 [1] : vector<8x128xf32> to vector<8xf32>
    %11 = vector.shape_cast %10 : vector<8xf32> to vector<8x1xf32>
    %12 = vector.broadcast %11 : vector<8x1xf32> to vector<8x128xf32>
    %13 = arith.subf %9, %12 : vector<8x128xf32>
    %14 = math.exp %13 : vector<8x128xf32>
    %cst_10 = arith.constant dense<0.000000e+00> : vector<8xf32>
    %15 = vector.multi_reduction <add>, %14, %cst_10 [1] : vector<8x128xf32> to vector<8xf32>
    %16 = vector.shape_cast %15 : vector<8xf32> to vector<8x1xf32>
    %17 = tpu.reciprocal %16 {approx = true} : vector<8x1xf32> -> vector<8x1xf32>
    %18 = vector.broadcast %17 : vector<8x1xf32> to vector<8x128xf32>
    %19 = arith.mulf %14, %18 : vector<8x128xf32>
    %c0_11 = arith.constant 0 : index
    %c0_12 = arith.constant 0 : index
    %20 = vector.load %arg7[%c0_11, %c0_12] : memref<8x128xf32, #tpu.memory_space<vmem>>, vector<8x128xf32>
    tpu.vector_store %arg7[%c0_11, %c0_12], %19 {strides = array<i32>} : memref<8x128xf32, #tpu.memory_space<vmem>>, vector<8x128xf32>,
    %c0_13 = arith.constant 0 : index
    %c0_14 = arith.constant 0 : index
    %21 = vector.load %arg5[%c0_13, %c0_14] : memref<128x32xf32, #tpu.memory_space<vmem>>, vector<128x32xf32>
    %cst_15 = arith.constant dense<0.000000e+00> : vector<8x32xf32>
    %22 = tpu.matmul %19, %21, %cst_15 {dimension_numbers = #tpu.dot_dimension_numbers<[1], [0], [0], [1], [0, 0, 1, 1], [], []>} : vector<8x128xf32>, vector<128x32xf32>, vector<8x32xf32> -> vector<8x32xf32>
    %c0_16 = arith.constant 0 : index
    %c0_17 = arith.constant 0 : index
    %23 = vector.load %arg6[%c0_16, %c0_17] : memref<8x32xf32, #tpu.memory_space<vmem>>, vector<8x32xf32>
    tpu.vector_store %arg6[%c0_16, %c0_17], %22 {strides = array<i32>} : memref<8x32xf32, #tpu.memory_space<vmem>>, vector<8x32xf32>,
    return
  }
  func.func @transform_0(%arg0: i32) -> (i32, i32) {
    %c0_i32 = arith.constant 0 : i32
    %c0_i32_0 = arith.constant 0 : i32
    return %arg0, %c0_i32 : i32, i32
  }
  func.func @transform_1(%arg0: i32) -> (i32, i32) {
    %c0_i32 = arith.constant 0 : i32
    %c0_i32_0 = arith.constant 0 : i32
    %c0_i32_1 = arith.constant 0 : i32
    return %c0_i32, %c0_i32_0 : i32, i32
  }
  func.func @transform_2(%arg0: i32) -> (i32, i32) {
    %c0_i32 = arith.constant 0 : i32
    %c0_i32_0 = arith.constant 0 : i32
    %c0_i32_1 = arith.constant 0 : i32
    return %c0_i32, %c0_i32_0 : i32, i32
  }
  func.func @transform_3(%arg0: i32) -> (i32, i32) {
    %c0_i32 = arith.constant 0 : i32
    %c0_i32_0 = arith.constant 0 : i32
    %c0_i32_1 = arith.constant 0 : i32
    return %c0_i32, %c0_i32_0 : i32, i32
  }
  func.func @transform_4(%arg0: i32) -> (i32, i32) {
    %c0_i32 = arith.constant 0 : i32
    %c0_i32_0 = arith.constant 0 : i32
    %c0_i32_1 = arith.constant 0 : i32
    return %c0_i32, %c0_i32_0 : i32, i32
  }
  func.func @transform_5(%arg0: i32) -> (i32, i32) {
    %c0_i32 = arith.constant 0 : i32
    %c0_i32_0 = arith.constant 0 : i32
    return %arg0, %c0_i32 : i32, i32
  }
  func.func @transform_6(%arg0: i32) -> (i32, i32) {
    %c0_i32 = arith.constant 0 : i32
    %c0_i32_0 = arith.constant 0 : i32
    return %arg0, %c0_i32 : i32, i32
  }
}

</mosaic_0001>

<llo_original>
// kernel: tpu_custom_call.1
$region0: #{tpu_custom_call.1}
  #allocation0 [shape = 'u32[]', space=smem, size = 0x4, offset = 0x4, fixed_abs, tag = 'smem constant byte address 0x4 - core index']
  #allocation1 [shape = 'u32[72,128]{1,0:T(1,128)}', space=vmem, size = 0x9000, scoped, tag = 'internal scratch']
  %s0 = inlined_call_operand.vmem [shape: bf16[384,32], index: 0, kind: input, shape index: {}]
  %s1 = inlined_call_operand.vmem [shape: bf16[8,128], index: 1, kind: input, shape index: {}]
  %s2 = inlined_call_operand.vmem [shape: f32[32,128], index: 2, kind: input, shape index: {}]
  %s3 = inlined_call_operand.vmem [shape: f32[1,128], index: 3, kind: input, shape index: {}]
  %s4 = inlined_call_operand.vmem [shape: f32[128,32], index: 4, kind: input, shape index: {}]
  %s5 = inlined_call_operand.hbm [shape: f32[24,32], index: 5, kind: output, shape index: {0}]
  %s6 = inlined_call_operand.hbm [shape: f32[24,128], index: 6, kind: output, shape index: {1}]
  %7 = xla_tuple %s5, %s6
  %s8 = sld [smem:[#allocation0]]
  $region61: #{tpu_custom_call.1} parent=0
    _
  %s10 = ssub.s32 1, %s8
  %s11 = scalar_select 0, %s10, %s8
  $region1: #{tpu_custom_call.1} parent=0
    #allocation2 [shape = 'u8[8192]{0}', space=vmem, size = 0x2000, scoped, tag = 'output window, operand 0']
    #allocation3 [shape = 's32[2]{0}', space=sflag, size = 0x8, scoped, tag = 'scoped memory for tpu_custom_call.1']
    #allocation4 [shape = 'u8[8192]{0}', space=vmem, size = 0x2000, scoped, tag = 'output window, operand 1']
    #allocation5 [shape = 's32[2]{0}', space=sflag, size = 0x8, scoped, tag = 'scoped memory for tpu_custom_call.1']
    %12 = vsyncpa [#allocation3], 0
    %s13 = scalar_lea.sflag [#allocation3], 1
    %14 = vsyncpa %s13, 0
    %15 = vsyncpa [#allocation5], 0
    %s16 = scalar_lea.sflag [#allocation5], 1
    %17 = vsyncpa %s16, 0
    loop: start=0, step=1, limit=5
    $region2: #{tpu_custom_call.1} parent=1 // loop_pre_header
      _
    $region3: #{tpu_custom_call.1} parent=1 // loop_header
      %s19 = sphi 0, %s23
      %p20 = scmp.ge.s32.totalorder %s19, 5
      %s29 = sphi 0, %s31
      %s32 = sphi 0, %s29
      %s33 = sphi 0, %s32
      %s49 = sphi 0, %s33
      %s53 = sphi 0, %s53
      %s55 = sphi 0, %s53
      %s56 = sphi 0, %s55
      %s70 = sphi 0, %s56
      %s74 = sphi 0, %s74
      %s76 = sphi 0, %s74
      %s77 = sphi 0, %s76
      %s91 = sphi 0, %s77
      %s95 = sphi 0, %s95
      %s97 = sphi 0, %s95
      %s98 = sphi 0, %s97
      %s112 = sphi 0, %s98
      %s116 = sphi 0, %s116
      %s118 = sphi 0, %s116
      %s119 = sphi 0, %s118
      %s133 = sphi 0, %s119
      %s139 = sphi 0, %s141
      %s142 = sphi 0, %s139
      %s143 = sphi 0, %s142
      %s159 = sphi 0, %s143
      %s165 = sphi 0, %s167
      %s168 = sphi 0, %s165
      %s169 = sphi 0, %s168
      %s185 = sphi 0, %s169
    $region4: #{tpu_custom_call.1} parent=1 // loop_header_branch
      %22 = sbr.rel (%p20) target = $region8
    $region5: #{tpu_custom_call.1} parent=1 // loop_body
      %s24 = ssub.s32 %s19, 1
      %s25 = ssub.s32 %s19, 2
      %s26 = sadd.s32 %s19, 1
      %s27 = ssub.s32 %s19, %s26
      %p28 = scmp.eq.s32.totalorder %s27, 0
      %s30 = sadd.s32 %s29, 1
      %s31 = scalar_select %p28, %s29, %s30
      %p34 = pneg %p28
      %p35 = scmp.eq.s32.totalorder %s19, 2
      %p36 = por %p34, %p35
      %p37 = scmp.ne.s32.totalorder %s29, %s32
      %p38 = scmp.eq.s32.totalorder %s19, 0
      %p39 = por %p37, %p38
      %p40 = scmp.ne.s32.totalorder %s29, %s32
      %p41 = scmp.eq.s32.totalorder %s24, 2
      %p42 = por %p40, %p41
      %p43 = scmp.ne.s32.totalorder %s32, %s33
      %p44 = scmp.eq.s32.totalorder %s24, 0
      %p45 = por %p43, %p44
      %p46 = scmp.ne.s32.totalorder %s32, %s33
      %p47 = scmp.eq.s32.totalorder %s25, 2
      %p48 = por %p46, %p47
      %p50 = scmp.ne.s32.totalorder %s33, %s49
      %p51 = scmp.eq.s32.totalorder %s25, 0
      %p52 = por %p50, %p51
      %s54 = sadd.s32 %s53, 1
      %p57 = scmp.eq.s32.totalorder %s19, 2
      %p58 = scmp.ne.s32.totalorder %s53, %s55
      %p59 = scmp.eq.s32.totalorder %s19, 0
      %p60 = por %p58, %p59
      %p61 = scmp.ne.s32.totalorder %s53, %s55
      %p62 = scmp.eq.s32.totalorder %s24, 2
      %p63 = por %p61, %p62
      %p64 = scmp.ne.s32.totalorder %s55, %s56
      %p65 = scmp.eq.s32.totalorder %s24, 0
      %p66 = por %p64, %p65
      %p67 = scmp.ne.s32.totalorder %s55, %s56
      %p68 = scmp.eq.s32.totalorder %s25, 2
      %p69 = por %p67, %p68
      %p71 = scmp.ne.s32.totalorder %s56, %s70
      %p72 = scmp.eq.s32.totalorder %s25, 0
      %p73 = por %p71, %p72
      %s75 = sadd.s32 %s74, 1
      %p78 = scmp.eq.s32.totalorder %s19, 2
      %p79 = scmp.ne.s32.totalorder %s74, %s76
      %p80 = scmp.eq.s32.totalorder %s19, 0
      %p81 = por %p79, %p80
      %p82 = scmp.ne.s32.totalorder %s74, %s76
      %p83 = scmp.eq.s32.totalorder %s24, 2
      %p84 = por %p82, %p83
      %p85 = scmp.ne.s32.totalorder %s76, %s77
      %p86 = scmp.eq.s32.totalorder %s24, 0
      %p87 = por %p85, %p86
      %p88 = scmp.ne.s32.totalorder %s76, %s77
      %p89 = scmp.eq.s32.totalorder %s25, 2
      %p90 = por %p88, %p89
      %p92 = scmp.ne.s32.totalorder %s77, %s91
      %p93 = scmp.eq.s32.totalorder %s25, 0
      %p94 = por %p92, %p93
      %s96 = sadd.s32 %s95, 1
      %p99 = scmp.eq.s32.totalorder %s19, 2
      %p100 = scmp.ne.s32.totalorder %s95, %s97
      %p101 = scmp.eq.s32.totalorder %s19, 0
      %p102 = por %p100, %p101
      %p103 = scmp.ne.s32.totalorder %s95, %s97
      %p104 = scmp.eq.s32.totalorder %s24, 2
      %p105 = por %p103, %p104
      %p106 = scmp.ne.s32.totalorder %s97, %s98
      %p107 = scmp.eq.s32.totalorder %s24, 0
      %p108 = por %p106, %p107
      %p109 = scmp.ne.s32.totalorder %s97, %s98
      %p110 = scmp.eq.s32.totalorder %s25, 2
      %p111 = por %p109, %p110
      %p113 = scmp.ne.s32.totalorder %s98, %s112
      %p114 = scmp.eq.s32.totalorder %s25, 0
      %p115 = por %p113, %p114
      %s117 = sadd.s32 %s116, 1
      %p120 = scmp.eq.s32.totalorder %s19, 2
      %p121 = scmp.ne.s32.totalorder %s116, %s118
      %p122 = scmp.eq.s32.totalorder %s19, 0
      %p123 = por %p121, %p122
      %p124 = scmp.ne.s32.totalorder %s116, %s118
      %p125 = scmp.eq.s32.totalorder %s24, 2
      %p126 = por %p124, %p125
      %p127 = scmp.ne.s32.totalorder %s118, %s119
      %p128 = scmp.eq.s32.totalorder %s24, 0
      %p129 = por %p127, %p128
      %p130 = scmp.ne.s32.totalorder %s118, %s119
      %p131 = scmp.eq.s32.totalorder %s25, 2
      %p132 = por %p130, %p131
      %p134 = scmp.ne.s32.totalorder %s119, %s133
      %p135 = scmp.eq.s32.totalorder %s25, 0
      %p136 = por %p134, %p135
      %s137 = ssub.s32 %s19, %s26
      %p138 = scmp.eq.s32.totalorder %s137, 0
      %s140 = sadd.s32 %s139, 1
      %s141 = scalar_select %p138, %s139, %s140
      %p144 = pneg %p138
      %p145 = scmp.eq.s32.totalorder %s19, 2
      %p146 = por %p144, %p145
      %p147 = scmp.ne.s32.totalorder %s139, %s142
      %p148 = scmp.eq.s32.totalorder %s19, 0
      %p149 = por %p147, %p148
      %p150 = scmp.ne.s32.totalorder %s139, %s142
      %p151 = scmp.eq.s32.totalorder %s24, 2
      %p152 = por %p150, %p151
      %p153 = scmp.ne.s32.totalorder %s142, %s143
      %p154 = scmp.eq.s32.totalorder %s24, 0
      %p155 = por %p153, %p154
      %p156 = scmp.ne.s32.totalorder %s142, %s143
      %p157 = scmp.eq.s32.totalorder %s25, 2
      %p158 = por %p156, %p157
      %p160 = scmp.ne.s32.totalorder %s143, %s159
      %p161 = scmp.eq.s32.totalorder %s25, 0
      %p162 = por %p160, %p161
      %s163 = ssub.s32 %s19, %s26
      %p164 = scmp.eq.s32.totalorder %s163, 0
      %s166 = sadd.s32 %s165, 1
      %s167 = scalar_select %p164, %s165, %s166
      %p170 = pneg %p164
      %p171 = scmp.eq.s32.totalorder %s19, 2
      %p172 = por %p170, %p171
      %p173 = scmp.ne.s32.totalorder %s165, %s168
      %p174 = scmp.eq.s32.totalorder %s19, 0
      %p175 = por %p173, %p174
      %p176 = scmp.ne.s32.totalorder %s165, %s168
      %p177 = scmp.eq.s32.totalorder %s24, 2
      %p178 = por %p176, %p177
      %p179 = scmp.ne.s32.totalorder %s168, %s169
      %p180 = scmp.eq.s32.totalorder %s24, 0
      %p181 = por %p179, %p180
      %p182 = scmp.ne.s32.totalorder %s168, %s169
      %p183 = scmp.eq.s32.totalorder %s25, 2
      %p184 = por %p182, %p183
      %p186 = scmp.ne.s32.totalorder %s169, %s185
      %p187 = scmp.eq.s32.totalorder %s25, 0
      %p188 = por %p186, %p187
      %p189 = scmp.le.s32.totalorder 1, %s19
      %p190 = scmp.lt.s32.totalorder %s19, 4
      %p191 = pnand %p189, %p190
      %p192 = pneg %p191
      // Predicated region
      $region9: #{tpu_custom_call.1} parent=5 // pred_check
        _
      $region10: #{tpu_custom_call.1} parent=5 // pred_check_branch
        %194 = sbr.rel (%p191) target = $region12
      $region11: #{tpu_custom_call.1} parent=5 // pred_region
        %s195 = ssub.s32 %s19, 1
        // Predicated region
        $region13: #{tpu_custom_call.1} parent=11 // pred_check
          %p196 = pneg %p66
        $region14: #{tpu_custom_call.1} parent=11 // pred_check_branch
          %198 = sbr.rel (%p196) target = $region16
        $region15: #{tpu_custom_call.1} parent=11 // pred_region
          _
        $region16: #{tpu_custom_call.1} parent=11 // pred_fallthru
          _
        // Predicated region
        $region17: #{tpu_custom_call.1} parent=11 // pred_check
          %p199 = pneg %p87
        $region18: #{tpu_custom_call.1} parent=11 // pred_check_branch
          %201 = sbr.rel (%p199) target = $region20
        $region19: #{tpu_custom_call.1} parent=11 // pred_region
          _
        $region20: #{tpu_custom_call.1} parent=11 // pred_fallthru
          _
        // Predicated region
        $region21: #{tpu_custom_call.1} parent=11 // pred_check
          %p202 = pneg %p108
        $region22: #{tpu_custom_call.1} parent=11 // pred_check_branch
          %204 = sbr.rel (%p202) target = $region24
        $region23: #{tpu_custom_call.1} parent=11 // pred_region
          _
        $region24: #{tpu_custom_call.1} parent=11 // pred_fallthru
          _
        // Predicated region
        $region25: #{tpu_custom_call.1} parent=11 // pred_check
          %p205 = pneg %p129
        $region26: #{tpu_custom_call.1} parent=11 // pred_check_branch
          %207 = sbr.rel (%p205) target = $region28
        $region27: #{tpu_custom_call.1} parent=11 // pred_region
          _
        $region28: #{tpu_custom_call.1} parent=11 // pred_fallthru
          _
      $region12: #{tpu_custom_call.1} parent=5 // pred_fallthru
        _
      %p208 = scmp.lt.s32.totalorder %s19, 3
      // Predicated region
      $region29: #{tpu_custom_call.1} parent=5 // pred_check
        %p209 = pneg %p208
      $region30: #{tpu_custom_call.1} parent=5 // pred_check_branch
        %211 = sbr.rel (%p209) target = $region32
      $region31: #{tpu_custom_call.1} parent=5 // pred_region
        // Predicated region
        $region33: #{tpu_custom_call.1} parent=31 // pred_check
          %p212 = pneg %p39
        $region34: #{tpu_custom_call.1} parent=31 // pred_check_branch
          %214 = sbr.rel (%p212) target = $region36
        $region35: #{tpu_custom_call.1} parent=31 // pred_region
          %s215 = smul.u32 16, %s19
          %p216 = scmp.lt.s32.totalorder %s215, 47
          %s217 = scalar_select %p216, %s215, 47
          %s218 = smul.addr %s217, 4
          %s219 = scalar_lea.vmem %s0, %s218
          %s220 = smul.u32 16, %s19
        $region36: #{tpu_custom_call.1} parent=31 // pred_fallthru
          _
      $region32: #{tpu_custom_call.1} parent=5 // pred_fallthru
        _
      %p221 = scmp.le.s32.totalorder 1, %s19
      %p222 = scmp.lt.s32.totalorder %s19, 4
      %p223 = pnand %p221, %p222
      %p224 = pneg %p223
      // Predicated region
      $region37: #{tpu_custom_call.1} parent=5 // pred_check
        _
      $region38: #{tpu_custom_call.1} parent=5 // pred_check_branch
        %226 = sbr.rel (%p223) target = $region40
      $region39: #{tpu_custom_call.1} parent=5 // pred_region
        %s227 = ssub.s32 %s19, 1
        %s228 = smul.u32 16, %s24
        %p229 = scmp.lt.s32.totalorder %s228, 47
        %s230 = scalar_select %p229, %s228, 47
        %s231 = smul.addr %s230, 4
        %s232 = scalar_lea.vmem %s0, %s231
        %p233 = pneg %p45
        %p234 = pneg %p42
        %p235 = pneg %p66
        %p236 = pneg %p63
        %p237 = pneg %p87
        %p238 = pneg %p84
        %p239 = pneg %p108
        %p240 = pneg %p105
        %p241 = pneg %p129
        %p242 = pneg %p126
        %p243 = pneg %p155
        %p244 = pneg %p152
        %s245 = sand.u32 %s142, 1
        %s246 = scalar_lea.sflag [#allocation3], %s245
        %s247 = sand.u32 %s142, 1
        %s248 = smul.addr %s247, 8
        %s249 = scalar_lea.vmem [#allocation2], %s248
        %p250 = pneg %p181
        %p251 = pneg %p178
        %s252 = sand.u32 %s168, 1
        %s253 = scalar_lea.sflag [#allocation5], %s252
        %s254 = sand.u32 %s168, 1
        %s255 = smul.addr %s254, 8
        %s256 = scalar_lea.vmem [#allocation4], %s255
        %s257 = smul.u32 16, %s24
        %p258 = scmp.lt.s32.totalorder %s257, 47
        %s259 = scalar_select %p258, %s257, 47
        %s260 = smul.addr %s259, 4
        %s261 = scalar_lea.vmem %s0, %s260
        %s262 = smul.u32 16, %s24
        %v263 = vld [vmem:[%s1] sm:$0xf]
        %v264 = vld [vmem:[%s261] sm:$0xf]
        %v265 = vld [vmem:[%s261 + $0x4] sm:$0xf]
        %v266 = vld [vmem:[%s261 + $0x8] sm:$0xf]
        %v267 = vld [vmem:[%s261 + $0xc] sm:$0xf]
        %v268 = vld [vmem:[%s261 + $0x10] sm:$0xf]
        %v269 = vld [vmem:[%s261 + $0x14] sm:$0xf]
        %v270 = vld [vmem:[%s261 + $0x18] sm:$0xf]
        %v271 = vld [vmem:[%s261 + $0x1c] sm:$0xf]
        %v272 = vld [vmem:[%s261 + $0x20] sm:$0xf]
        %v273 = vld [vmem:[%s261 + $0x24] sm:$0xf]
        %v274 = vld [vmem:[%s261 + $0x28] sm:$0xf]
        %v275 = vld [vmem:[%s261 + $0x2c] sm:$0xf]
        %v276 = vld [vmem:[%s261 + $0x30] sm:$0xf]
        %v277 = vld [vmem:[%s261 + $0x34] sm:$0xf]
        %v278 = vld [vmem:[%s261 + $0x38] sm:$0xf]
        %v279 = vld [vmem:[%s261 + $0x3c] sm:$0xf]
        %v296 = vunpack.c.l.b16 %v264
        %v297 = vunpack.c.l.b16 %v265
        %v298 = vunpack.c.l.b16 %v266
        %v299 = vunpack.c.l.b16 %v267
        %v300 = vunpack.c.l.b16 %v268
        %v301 = vunpack.c.l.b16 %v269
        %v302 = vunpack.c.l.b16 %v270
        %v303 = vunpack.c.l.b16 %v271
        %v304 = vunpack.c.l.b16 %v272
        %v305 = vunpack.c.l.b16 %v273
        %v306 = vunpack.c.l.b16 %v274
        %v307 = vunpack.c.l.b16 %v275
        %v308 = vunpack.c.l.b16 %v276
        %v309 = vunpack.c.l.b16 %v277
        %v310 = vunpack.c.l.b16 %v278
        %v311 = vunpack.c.l.b16 %v279
        %v312 = vpack.c.b16 %v297, %v296
        %v313 = vpack.c.b16 %v299, %v298
        %v314 = vpack.c.b16 %v301, %v300
        %v315 = vpack.c.b16 %v303, %v302
        %v316 = vpack.c.b16 %v305, %v304
        %v317 = vpack.c.b16 %v307, %v306
        %v318 = vpack.c.b16 %v309, %v308
        %v319 = vpack.c.b16 %v311, %v310
        %328 = vmatpush.bf16.msra.mxu0 %v319
        %329 = vmatpush.bf16.msra.mxu0 %v318
        %330 = vmatpush.bf16.msra.mxu0 %v317
        %331 = vmatpush.bf16.msra.mxu0 %v316
        %332 = vmatpush.bf16.msra.mxu0 %v315
        %333 = vmatpush.bf16.msra.mxu0 %v314
        %334 = vmatpush.bf16.msra.mxu0 %v313
        %335 = vmatpush.bf16.msra.mxu0 %v312
        %336 = vmatmul.bf16.gmra.mxu0 %v263
        %v337 = vpop.f32.mrf.mxu0
        %v338 = vadd.f32 0.0, %v337
        %v339 = vpop.f32.mrf.mxu0
        %340 = vdwg.mxu0
        %v341 = vmul.f32 %v338, 0.0625
        %v342 = vld [vmem:[%s2] sm:$0xff]
        %v343 = vld [vmem:[%s2 + $0x8] sm:$0xff]
        %v344 = vld [vmem:[%s2 + $0x10] sm:$0xff]
        %v345 = vld [vmem:[%s2 + $0x18] sm:$0xff]
        %v346 = vld [vmem:[%s3] sm:$0x1]
        %v348 = vperm.slane %v346, 0
        %vm350 = vcmask 261120
        %v352 = vsel %vm350, %v341, 0
        %354 = vmatpush.msra.mxu0 0.0
        %355 = vmatpush.msra.mxu0 0.0
        %356 = vmatpush.msra.mxu0 0.0
        %357 = vmatpush.msra.mxu0 0.0
        %358 = vmatpush.msra.mxu0 0.0
        %359 = vmatpush.msra.mxu0 0.0
        %360 = vmatpush.msra.mxu0 0.0
        %361 = vmatpush.msra.mxu0 0.0
        %362 = vmatpush.msra.mxu0 0.0
        %363 = vmatpush.msra.mxu0 0.0
        %364 = vmatpush.msra.mxu0 0.0
        %365 = vmatpush.msra.mxu0 0.0
        %366 = vmatpush.msra.mxu0 %v345
        %367 = vmatpush.msra.mxu0 %v344
        %368 = vmatpush.msra.mxu0 %v343
        %369 = vmatpush.msra.mxu0 %v342
        %370 = vmatmul.f32.gmra.mxu0 %v352
        %v371 = vpop.f32.mrf.mxu0
        %v372 = vadd.f32 %v348, %v371
        %373 = vdwg.mxu0
        %374 = vmax.xlane.f32.xlu0 %v372
        %v375 = vpop.xlane.xlu0 %374
        %v376 = vsub.f32 %v372, %v375
        %v377 = vmul.f32 %v376, 1.442695
        %v378 = vpow.pop %v377
        %379 = vadd.xlane.f32.xlu0 %v378
        %v380 = vpop.xlane.xlu0 %379
        %v381 = vrcp.pop %v380
        %v382 = vmul.f32 %v378, %v381
        %383 = vst [vmem:[%s256] sm:$0xff] %v382
        %v384 = vld [vmem:[%s4] sm:$0xff]
        %v385 = vld [vmem:[%s4 + $0x8] sm:$0xff]
        %v386 = vld [vmem:[%s4 + $0x10] sm:$0xff]
        %v387 = vld [vmem:[%s4 + $0x18] sm:$0xff]
        %v388 = vld [vmem:[%s4 + $0x20] sm:$0xff]
        %v389 = vld [vmem:[%s4 + $0x28] sm:$0xff]
        %v390 = vld [vmem:[%s4 + $0x30] sm:$0xff]
        %v391 = vld [vmem:[%s4 + $0x38] sm:$0xff]
        %v392 = vld [vmem:[%s4 + $0x40] sm:$0xff]
        %v393 = vld [vmem:[%s4 + $0x48] sm:$0xff]
        %v394 = vld [vmem:[%s4 + $0x50] sm:$0xff]
        %v395 = vld [vmem:[%s4 + $0x58] sm:$0xff]
        %v396 = vld [vmem:[%s4 + $0x60] sm:$0xff]
        %v397 = vld [vmem:[%s4 + $0x68] sm:$0xff]
        %v398 = vld [vmem:[%s4 + $0x70] sm:$0xff]
        %v399 = vld [vmem:[%s4 + $0x78] sm:$0xff]
        %400 = vmatpush.msra.mxu0 %v399
        %401 = vmatpush.msra.mxu0 %v398
        %402 = vmatpush.msra.mxu0 %v397
        %403 = vmatpush.msra.mxu0 %v396
        %404 = vmatpush.msra.mxu0 %v395
        %405 = vmatpush.msra.mxu0 %v394
        %406 = vmatpush.msra.mxu0 %v393
        %407 = vmatpush.msra.mxu0 %v392
        %408 = vmatpush.msra.mxu0 %v391
        %409 = vmatpush.msra.mxu0 %v390
        %410 = vmatpush.msra.mxu0 %v389
        %411 = vmatpush.msra.mxu0 %v388
        %412 = vmatpush.msra.mxu0 %v387
        %413 = vmatpush.msra.mxu0 %v386
        %414 = vmatpush.msra.mxu0 %v385
        %415 = vmatpush.msra.mxu0 %v384
        %416 = vmatmul.f32.gmra.mxu0 %v382
        %v417 = vpop.f32.mrf.mxu0
        %v418 = vadd.f32 0.0, %v417
        %419 = vdwg.mxu0
        %420 = vst.msk [vmem:[%s249] sm:$0xff] %vm350, %v418
        %s421 = sand.u32 %s142, 1
        %s422 = scalar_lea.sflag [#allocation3], %s421
        %s423 = sand.u32 %s142, 1
        %s424 = smul.addr %s423, 8
        %s425 = scalar_lea.vmem [#allocation2], %s424
        %s426 = sand.u32 %s168, 1
        %s427 = scalar_lea.sflag [#allocation5], %s426
        %s428 = sand.u32 %s168, 1
        %s429 = smul.addr %s428, 8
        %s430 = scalar_lea.vmem [#allocation4], %s429
        // Predicated region
        $region41: #{tpu_custom_call.1} parent=39 // pred_check
          %p431 = pneg %p152
        $region42: #{tpu_custom_call.1} parent=39 // pred_check_branch
          %433 = sbr.rel (%p431) target = $region44
        $region43: #{tpu_custom_call.1} parent=39 // pred_region
          %435 = vsyncadd %s422, 0
          %s436 = smul.addr %s24, 8
          %s437 = scalar_lea.hbm %s5, %s436
          %s439 = sshll.u32 %s425, 4
          %s440 = int_to_ptr.vmem [resolvable:$true] %s439
          %s441 = sshll.u32 %s437, 4
          %s442 = int_to_ptr.hbm [resolvable:$true] %s441
          %444 = dma.vmem_to_hbm [thread:$0]  %s440, 128, %s442, %s422
        $region44: #{tpu_custom_call.1} parent=39 // pred_fallthru
          _
        // Predicated region
        $region45: #{tpu_custom_call.1} parent=39 // pred_check
          %p445 = pneg %p178
        $region46: #{tpu_custom_call.1} parent=39 // pred_check_branch
          %447 = sbr.rel (%p445) target = $region48
        $region47: #{tpu_custom_call.1} parent=39 // pred_region
          %449 = vsyncadd %s427, 0
          %s450 = smul.addr %s24, 8
          %s451 = scalar_lea.hbm %s6, %s450
          %s453 = sshll.u32 %s430, 4
          %s454 = int_to_ptr.vmem [resolvable:$true] %s453
          %s455 = sshll.u32 %s451, 4
          %s456 = int_to_ptr.hbm [resolvable:$true] %s455
          %458 = dma.vmem_to_hbm [thread:$0]  %s454, 128, %s456, %s427
        $region48: #{tpu_custom_call.1} parent=39 // pred_fallthru
          _
      $region40: #{tpu_custom_call.1} parent=5 // pred_fallthru
        _
      %p459 = scmp.le.s32.totalorder 2, %s19
      // Predicated region
      $region49: #{tpu_custom_call.1} parent=5 // pred_check
        %p460 = pneg %p459
      $region50: #{tpu_custom_call.1} parent=5 // pred_check_branch
        %462 = sbr.rel (%p460) target = $region52
      $region51: #{tpu_custom_call.1} parent=5 // pred_region
        %s463 = ssub.s32 %s19, 2
        // Predicated region
        $region53: #{tpu_custom_call.1} parent=51 // pred_check
          %p464 = pneg %p158
        $region54: #{tpu_custom_call.1} parent=51 // pred_check_branch
          %466 = sbr.rel (%p464) target = $region56
        $region55: #{tpu_custom_call.1} parent=51 // pred_region
          %s467 = sand.u32 %s143, 1
          %s468 = scalar_lea.sflag [#allocation3], %s467
          %s469 = sand.u32 %s143, 1
          %s470 = smul.addr %s469, 8
          %s471 = scalar_lea.vmem [#allocation2], %s470
          %473 = dma.done %s468, 128
        $region56: #{tpu_custom_call.1} parent=51 // pred_fallthru
          _
        // Predicated region
        $region57: #{tpu_custom_call.1} parent=51 // pred_check
          %p474 = pneg %p184
        $region58: #{tpu_custom_call.1} parent=51 // pred_check_branch
          %476 = sbr.rel (%p474) target = $region60
        $region59: #{tpu_custom_call.1} parent=51 // pred_region
          %s477 = sand.u32 %s169, 1
          %s478 = scalar_lea.sflag [#allocation5], %s477
          %s479 = sand.u32 %s169, 1
          %s480 = smul.addr %s479, 8
          %s481 = scalar_lea.vmem [#allocation4], %s480
          %483 = dma.done %s478, 128
        $region60: #{tpu_custom_call.1} parent=51 // pred_fallthru
          _
      $region52: #{tpu_custom_call.1} parent=5 // pred_fallthru
        _
    $region6: #{tpu_custom_call.1} parent=1 // loop_footer
      %s23 = sadd.s32 1, %s19
    $region7: #{tpu_custom_call.1} parent=1 // loop_footer_branch
      %18 = sbr.rel target = $region3
    $region8: #{tpu_custom_call.1} parent=1 // loop_exit
      _
    %484 = vsyncpa [#allocation3], 1
    %s485 = scalar_lea.sflag [#allocation3], 1
    %486 = vsyncpa %s485, 1
    %487 = vsyncpa [#allocation5], 1
    %s488 = scalar_lea.sflag [#allocation5], 1
    %489 = vsyncpa %s488, 1

</llo_original>
